<compile_context>
chip_gen: v5e
topology: v5e:2x2
jax: 0.10.0
libtpu: 0.0.40
codegen_flags: <defaults>
</compile_context>

<pallas_src>
import jax
import jax.numpy as jnp
from jax import lax
from jax.experimental import pallas as pl
from jax.experimental.pallas import tpu as pltpu


def _round_up(x, m):
    return (x + m - 1) // m * m


def _default_vmem_limit_bytes():
    """Generation-aware VMEM request: ~40 MiB on 64 MiB chips (v7x), ~100 MiB on 128 MiB chips."""
    cap = 64 * 1024 * 1024
    try:
        cap = int(pltpu.get_tpu_info().vmem_capacity_bytes)
    except Exception:
        pass  # conservative fallback works on every generation
    if cap <= 64 * 1024 * 1024:
        return 40 * 1024 * 1024
    return 100 * 1024 * 1024


# -----------------------------------------------------------------------------
# Kernel 1: fused ball query.  One pass over [B, S, N] computes exact squared
# distances (difference form) and writes, for every radius, the int32
# "point-index if inside the ball else N" tensor consumed by the K-smallest
# selection.  Tiled over N with lane-dense (S, tN) blocks; both axes parallel.
# -----------------------------------------------------------------------------
def _make_ballquery_kernel(radius_sq_list, n_points):
    def kernel(a_ref, b_ref, *out_refs):
        a = a_ref[...]                                       # (S, 3)  f32 centroids
        b = b_ref[...]                                       # (3, tN) f32 points (lane-dense N)
        # Exact squared distances (C == 3): cheap on the VPU, no MXU, no cancellation
        # near the radius boundary, inherently >= 0.
        d = (a[:, 0:1] - b[0:1, :]) ** 2
        d = d + (a[:, 1:2] - b[1:2, :]) ** 2
        d = d + (a[:, 2:3] - b[2:3, :]) ** 2                 # (S, tN)
        tN = b.shape[1]
        col = lax.broadcasted_iota(jnp.int32, (1, tN), 1) + pl.program_id(1) * tN
        for r, r2 in enumerate(radius_sq_list):
            out_refs[r][...] = jnp.where(d <= r2, col, n_points)
    return kernel


def _pick_lane_tile(N, S, n_out, budget_bytes):
    """Largest multiple-of-128 divisor of N whose padded VMEM footprint fits; else full N."""
    s_pad = _round_up(S, 8)
    # per-lane bytes: dbl-buffered f32 input column (3 sublanes padded to 8), dbl-buffered
    # int32 outputs, plus ~3 live (S, tN) intermediates (d, iota, where results).
    per_lane = 2 * 8 * 4 + n_out * 2 * s_pad * 4 + 3 * s_pad * 4
    fixed = 2 * s_pad * 128 * 4                 # (S, 3) centroid block, lane-padded to 128
    if N % 128 != 0:
        return N
    best, t = 128, 128
    while t <= N:
        if N % t == 0 and fixed + t * per_lane <= budget_bytes:
            best = t
        t += 128
    return best


def ball_query_all_radii(radius_list, xyz_t, new_xyz, *, vmem_limit_bytes=None):
    """xyz_t: [B, 3, N] f32, new_xyz: [B, S, 3] f32 ->
    one int32 [B, S, N] per radius: point index when inside the ball, else N."""
    if vmem_limit_bytes is None:
        vmem_limit_bytes = _default_vmem_limit_bytes()
    B, S, _ = new_xyz.shape
    N = xyz_t.shape[2]
    R = len(radius_list)
    tN = _pick_lane_tile(N, S, R, budget_bytes=(vmem_limit_bytes * 3) // 4)

    kernel = _make_ballquery_kernel([float(r) ** 2 for r in radius_list], N)
    flops = B * S * N * (9 + 2 * R)
    bytes_accessed = 4 * B * (S * 3 + 3 * N + R * S * N)
    return pl.pallas_call(
        kernel,
        out_shape=tuple(jax.ShapeDtypeStruct((B, S, N), jnp.int32) for _ in range(R)),
        grid_spec=pltpu.PrefetchScalarGridSpec(
            num_scalar_prefetch=0,
            grid=(B, N // tN),
            in_specs=[pl.BlockSpec((None, S, 3), lambda b, nt: (b, 0, 0)),
                      pl.BlockSpec((None, 3, tN), lambda b, nt: (b, 0, nt))],
            out_specs=tuple(pl.BlockSpec((None, S, tN), lambda b, nt: (b, 0, nt))
                            for _ in range(R)),
        ),
        compiler_params=pltpu.CompilerParams(
            dimension_semantics=("parallel", "parallel"),
            vmem_limit_bytes=vmem_limit_bytes),
        cost_estimate=pl.CostEstimate(flops=int(flops), transcendentals=0,
                                      bytes_accessed=int(bytes_accessed)),
    )(new_xyz, xyz_t)


# -----------------------------------------------------------------------------
# Kernel 2: per-scale PointNet MLP (1x1 convs == channel matmuls) + ReLU, then
# max over the K neighbour samples.  Grouped block is (K, tS, C0) in bf16; the
# MLP runs as chained (K*tS, Cj) @ (Cj, Cj+1) bf16 matmuls with f32 accumulate,
# bias/ReLU/max in f32.  The output tile is written transposed as (C_last, tS)
# so stores are lane-dense and no XLA transpose pass is needed afterwards.
# -----------------------------------------------------------------------------
def _make_msg_kernel(K, tS, channels):
    n_layers = len(channels) - 1

    def kernel(x_ref, *refs):
        out_ref = refs[-1]
        x = x_ref[...]                                            # (K, tS, C0)  matmul dtype
        h = x.reshape(K * tS, channels[0])
        for j in range(n_layers):
            w = refs[2 * j][...]                                  # (Cj, Cj+1)   matmul dtype
            bias = refs[2 * j + 1][...]                           # (1, Cj+1)    f32
            y = jnp.dot(h, w, preferred_element_type=jnp.float32) + bias
            y = jnp.maximum(y, 0.0)                               # bias + ReLU in f32
            h = y if j == n_layers - 1 else y.astype(w.dtype)     # narrow only the matmul feed
        pooled = jnp.max(h.reshape(K, tS, channels[-1]), axis=0)  # (tS, C_last) f32
        out_ref[...] = pooled.T.astype(out_ref.dtype)             # (C_last, tS) lane-dense store

    return kernel


def _pick_s_tile(S, K, channels, in_itemsize, budget_bytes):
    """Largest multiple-of-128 divisor of S whose *padded* working set fits; else full S."""
    c0, c_last, max_c = channels[0], channels[-1], max(channels)

    def fits(t):
        # double-buffered DMA blocks, padded to (8 sublanes, 128 lanes) memory tiles
        in_blk = 2 * K * _round_up(t, 8) * _round_up(c0, 128) * in_itemsize
        out_blk = 2 * _round_up(c_last, 8) * _round_up(t, 128) * 4
        # live f32 activations (a few (K*t, Cj) arrays), lane-padded to 128
        live = 3 * _round_up(K * t, 8) * _round_up(max_c, 128) * 4
        return in_blk + out_blk + live <= budget_bytes

    if S % 128 != 0:
        return S
    best, t = 128, 128
    while t <= S:
        if S % t == 0 and fits(t):
            best = t
        t += 128
    return best


def msg_pointnet_max(grouped, weights, biases, *, vmem_limit_bytes=None):
    """grouped: [B, K, S, C0] (bf16/f32); weights[j]: [Cj, Cj+1]; biases[j]: [1, Cj+1] f32.
    Returns new_points [B, C_last, S] f32 (channel-major, matching the PyTorch layout)."""
    if vmem_limit_bytes is None:
        vmem_limit_bytes = _default_vmem_limit_bytes()
    B, K, S, C0 = grouped.shape
    channels = [C0] + [w.shape[1] for w in weights]
    c_last = channels[-1]
    in_itemsize = grouped.dtype.itemsize
    tS = _pick_s_tile(S, K, channels, in_itemsize,
                      budget_bytes=(vmem_limit_bytes * 3) // 4)

    kernel = _make_msg_kernel(K, tS, channels)
    # TODO(synk): on 128 MiB chips (v5e/v6e) pipeline_mode=pl.Buffered(3) on the grouped
    # block is worth sweeping; kept at default depth 2 to stay inside v7x's 64 MiB VMEM.
    in_specs = [pl.BlockSpec((None, K, tS, C0), lambda b, si: (b, 0, si, 0))]
    args = [grouped]
    for w, bvec in zip(weights, biases):
        in_specs.append(pl.BlockSpec(w.shape, lambda b, si: (0, 0)))
        in_specs.append(pl.BlockSpec(bvec.shape, lambda b, si: (0, 0)))
        args.append(w)
        args.append(bvec)

    flops = 2 * B * K * S * sum(ci * co for ci, co in zip(channels[:-1], channels[1:]))
    bytes_accessed = (grouped.size * in_itemsize
                      + sum(w.size * w.dtype.itemsize for w in weights)
                      + sum(bv.size * 4 for bv in biases)
                      + B * c_last * S * 4)

    return pl.pallas_call(
        kernel,
        out_shape=jax.ShapeDtypeStruct((B, c_last, S), jnp.float32),
        grid_spec=pltpu.PrefetchScalarGridSpec(
            num_scalar_prefetch=0,
            grid=(B, S // tS),
            in_specs=in_specs,
            out_specs=pl.BlockSpec((None, c_last, tS), lambda b, si: (b, 0, si)),
        ),
        compiler_params=pltpu.CompilerParams(
            dimension_semantics=("parallel", "parallel"),
            vmem_limit_bytes=vmem_limit_bytes),
        cost_estimate=pl.CostEstimate(flops=int(flops), transcendentals=0,
                                      bytes_accessed=int(bytes_accessed)),
    )(*args)


# -----------------------------------------------------------------------------
# Kernel 3: farthest point sampling, lane-major.  xyz[b] is VMEM-resident both as
# (N,3) (dynamic sublane reads/writes of the selected centroid) and (3,N) (lane-
# dense distance math); the running min-distance is a (1, N) VMEM scratch.
# -----------------------------------------------------------------------------
def _fps_kernel(xyz_ref, xyzt_ref, out_ref, mind_ref):
    N = xyzt_ref.shape[1]
    S = out_ref.shape[0]
    xyz_t = xyzt_ref[...]                                            # (3, N) f32, VMEM resident
    mind_ref[...] = jnp.full(mind_ref.shape, 1e10, jnp.float32)
    col_i = lax.broadcasted_iota(jnp.int32, (1, N), 1)               # (1, N) int indices
    col_f = col_i.astype(jnp.float32)                                # (1, N) float indices

    def body(i, far):
        # write the selected centroid position (dynamic sublane slice + store)
        out_ref[pl.ds(i, 1), :] = xyz_ref[pl.ds(far, 1), :]
        # lane-major distance update
        onehot = (col_i == far).astype(jnp.float32)                  # (1, N)
        cent = jnp.sum(xyz_t * onehot, axis=1, keepdims=True)        # (3, 1) selected coords
        d = jnp.sum((xyz_t - cent) ** 2, axis=0, keepdims=True)      # (1, N) lane-dense
        mind = jnp.minimum(mind_ref[...], d)
        mind_ref[...] = mind
        m = jnp.max(mind)                                            # scalar
        # first index attaining the max (matches argmax tie-breaking); exact for N < 2^24
        return jnp.min(jnp.where(mind >= m, col_f, float(N))).astype(jnp.int32)

    lax.fori_loop(0, S, body, jnp.int32(0))
    # TODO(synk): PyTorch FPS starts from a random point; we start deterministically at index 0.


def farthest_point_sample_xyz(xyz, xyz_t, S):
    """xyz: [B, N, 3] f32, xyz_t: [B, 3, N] f32 -> sampled centroid positions [B, S, 3] f32."""
    B, N, C = xyz.shape
    return pl.pallas_call(
        _fps_kernel,
        out_shape=jax.ShapeDtypeStruct((B, S, C), xyz.dtype),
        grid_spec=pltpu.PrefetchScalarGridSpec(
            num_scalar_prefetch=0,
            grid=(B,),
            in_specs=[pl.BlockSpec((None, N, C), lambda b: (b, 0, 0)),
                      pl.BlockSpec((None, C, N), lambda b: (b, 0, 0))],
            out_specs=pl.BlockSpec((None, S, C), lambda b: (b, 0, 0)),
            scratch_shapes=[pltpu.VMEM((1, N), jnp.float32)],
        ),
        compiler_params=pltpu.CompilerParams(dimension_semantics=("parallel",)),
    )(xyz, xyz_t)


# -----------------------------------------------------------------------------
# Plain-JAX glue: K-smallest selection (top_k) and the neighbour gather.
# -----------------------------------------------------------------------------
def index_points(points, idx):
    """points: [B, N, D], idx: [B, ...] int -> [B, ..., D]."""
    B = points.shape[0]
    batch = jnp.arange(B).reshape((B,) + (1,) * (idx.ndim - 1))
    return points[batch, idx]


# -----------------------------------------------------------------------------
# Module
# -----------------------------------------------------------------------------
class PointNetSetAbstractionMsgPallas:
    def __init__(self, ratio, radius_list, max_sample_list, mlp_list, key,
                 matmul_dtype=jnp.bfloat16):
        self.ratio = ratio
        self.radius_list = radius_list
        self.max_sample_list = max_sample_list
        self.mlp_list = mlp_list
        self.matmul_dtype = matmul_dtype
        self.vmem_limit_bytes = _default_vmem_limit_bytes()
        # Deterministic synthetic parameters; conv weights stored pre-transposed [Cin, Cout]
        # and pre-cast to the matmul dtype (bf16) so the grouped-slab DMA and the MXU feed
        # are half-width.  Biases stay f32 (bias/ReLU/max run in f32).
        # TODO(synk): NetUtil.SeqPointNetConv2d source not provided; assumed per-layer
        # Conv2d(1x1, bias) + ReLU.  Eval-mode BatchNorm would be folded into W / bias here
        # (per-channel scale/shift) at zero runtime cost.
        self.params = []
        for channels in mlp_list:
            ws, bs = [], []
            for cin, cout in zip(channels[:-1], channels[1:]):
                key, kw, kb = jax.random.split(key, 3)
                w = jax.random.normal(kw, (cin, cout), jnp.float32) / jnp.sqrt(float(cin))
                ws.append(w.astype(matmul_dtype))
                bs.append(jax.random.normal(kb, (1, cout), jnp.float32) * 0.01)
            self.params.append((ws, bs))

    def __call__(self, xyz, features):
        """xyz: [B, N, 3], features: [B, N, D]
        -> new_xyz [B, 3, S], new_points_concat [B, sum(C_out), S]"""
        B, N, C = xyz.shape
        S = int(N * self.ratio)

        xyz_t = jnp.transpose(xyz, (0, 2, 1))                          # [B, 3, N] lane-dense N
        new_xyz = farthest_point_sample_xyz(xyz, xyz_t, S)             # [B, S, 3]   (Pallas)
        feats = features.astype(self.matmul_dtype)                     # cast once, before gather

        # Fused front end, shared across ALL scales: one [B,S,N] pass emits the per-radius
        # "index-or-N" tensors directly (exact distances, radius^2 applied in-kernel).
        grp_all = ball_query_all_radii(self.radius_list, xyz_t, new_xyz,
                                       vmem_limit_bytes=self.vmem_limit_bytes)

        new_points_list = []
        for i, radius in enumerate(self.radius_list):
            K = self.max_sample_list[i]
            # K smallest indices == first K in-ball points (ascending); streaming O(N*K)
            # top-k instead of a full O(N log N) sort.  Out-of-ball slots carry N.
            grp = -lax.top_k(-grp_all[i], K)[0]                        # [B, S, K]
            first = grp[:, :, :1]                                      # centroid itself is always in-ball
            grp = jnp.where(grp == N, first, grp)
            # Gather with transposed indices so the grouped tensor lands directly in
            # [B, K, S, D] order (no extra full-tensor transpose pass over HBM).
            # TODO(synk): fusing this gather into the MLP kernel (VMEM-resident feature table
            # + in-kernel dynamic gather) needs a reliably-lowering gather; left in XLA.
            grouped = index_points(feats, jnp.transpose(grp, (0, 2, 1)))    # [B, K, S, D]
            ws, bs = self.params[i]
            new_points_list.append(
                msg_pointnet_max(grouped, ws, bs,
                                 vmem_limit_bytes=self.vmem_limit_bytes))   # [B, C_out_i, S]

        new_xyz_out = jnp.transpose(new_xyz, (0, 2, 1))                # [B, 3, S]
        new_points_concat = jnp.concatenate(new_points_list, axis=1)   # [B, sum(C_out), S]
        return new_xyz_out, new_points_concat


if __name__ == "__main__":
    key = jax.random.PRNGKey(0)
    k_xyz, k_feat, k_param = jax.random.split(key, 3)

    B, N, C, D = 2, 16, 3, 4
    xyz = jax.random.uniform(k_xyz, (B, N, C), dtype=jnp.float32)
    features = jax.random.normal(k_feat, (B, N, D), dtype=jnp.float32)

    module = PointNetSetAbstractionMsgPallas(
        ratio=0.5,
        radius_list=[0.25, 0.5],
        max_sample_list=[4, 8],
        mlp_list=[[D, 8, 16], [D, 16, 32]],
        key=k_param,
    )

    new_xyz, new_points = module(xyz, features)
    jax.block_until_ready((new_xyz, new_points))

    S = N // 2
    assert new_xyz.shape == (B, C, S), new_xyz.shape
    assert new_points.shape == (B, 16 + 32, S), new_points.shape
    assert new_xyz.dtype == jnp.float32 and new_points.dtype == jnp.float32
    assert bool(jnp.all(jnp.isfinite(new_points)))

    print("KERNEL_OK")
</pallas_src>

<mosaic_0001>
module attributes {stable_mosaic.version = 11 : i64} {
  func.func @_fps_kernel(%arg0: i32, %arg1: memref<1x16x3xf32, #tpu.memory_space<vmem>>, %arg2: memref<1x3x16xf32, #tpu.memory_space<vmem>>, %arg3: memref<1x8x3xf32, #tpu.memory_space<vmem>>, %arg4: memref<1x16xf32, #tpu.memory_space<vmem>>) attributes {dimension_semantics = [#tpu.dimension_semantics<parallel>], iteration_bounds = array<i64: 2>, scalar_prefetch = 0 : i64, scratch_operands = 1 : i64, tpu.core_type = #tpu.core_type<tc>, window_params = [{transform_indices = @transform_0, window_bounds = array<i64: 1, 16, 3>}, {transform_indices = @transform_1, window_bounds = array<i64: 1, 3, 16>}, {transform_indices = @transform_2, window_bounds = array<i64: 1, 8, 3>}]} {
    %c0 = arith.constant 0 : index
    %c0_0 = arith.constant 0 : index
    %c0_1 = arith.constant 0 : index
    %0 = vector.load %arg2[%c0, %c0_0, %c0_1] : memref<1x3x16xf32, #tpu.memory_space<vmem>>, vector<1x3x16xf32>
    %1 = vector.shape_cast %0 : vector<1x3x16xf32> to vector<3x16xf32>
    %cst = arith.constant 1.000000e+10 : f32
    %2 = vector.broadcast %cst : f32 to vector<1x16xf32>
    %c0_2 = arith.constant 0 : index
    %c0_3 = arith.constant 0 : index
    %3 = vector.load %arg4[%c0_2, %c0_3] : memref<1x16xf32, #tpu.memory_space<vmem>>, vector<1x16xf32>
    tpu.vector_store %arg4[%c0_2, %c0_3], %2 {strides = array<i32>} : memref<1x16xf32, #tpu.memory_space<vmem>>, vector<1x16xf32>,
    %4 = tpu.iota {dimensions = array<i32: 1>} : vector<1x16xi32>
    %5 = arith.sitofp %4 : vector<1x16xi32> to vector<1x16xf32>
    %c0_i32 = arith.constant 0 : i32
    %c0_i32_4 = arith.constant 0 : i32
    %c8_i32 = arith.constant 8 : i32
    %6 = arith.addi %c0_i32_4, %c8_i32 : i32
    %c1_i32 = arith.constant 1 : i32
    %7 = scf.for %arg5 = %c0_i32_4 to %6 step %c1_i32 iter_args(%arg6 = %c0_i32) -> (i32)  : i32 {
      %c0_6 = arith.constant 0 : index
      %8 = arith.index_cast %arg6 : i32 to index
      %c0_7 = arith.constant 0 : index
      %9 = vector.load %arg1[%c0_6, %8, %c0_7] : memref<1x16x3xf32, #tpu.memory_space<vmem>>, vector<1x1x3xf32>
      %10 = vector.shape_cast %9 : vector<1x1x3xf32> to vector<1x3xf32>
      %c0_8 = arith.constant 0 : index
      %11 = arith.index_cast %arg5 : i32 to index
      %c0_9 = arith.constant 0 : index
      %12 = vector.load %arg3[%c0_8, %11, %c0_9] : memref<1x8x3xf32, #tpu.memory_space<vmem>>, vector<1x1x3xf32>
      %13 = vector.shape_cast %12 : vector<1x1x3xf32> to vector<1x3xf32>
      %14 = vector.shape_cast %10 : vector<1x3xf32> to vector<1x1x3xf32>
      tpu.vector_store %arg3[%c0_8, %11, %c0_9], %14 {strides = array<i32>} : memref<1x8x3xf32, #tpu.memory_space<vmem>>, vector<1x1x3xf32>,
      %15 = vector.broadcast %arg6 : i32 to vector<1x16xi32>
      %16 = arith.cmpi eq, %4, %15 : vector<1x16xi32>
      %17 = arith.extui %16 : vector<1x16xi1> to vector<1x16xi32>
      %18 = arith.sitofp %17 : vector<1x16xi32> to vector<1x16xf32>
      %19 = vector.broadcast %18 : vector<1x16xf32> to vector<3x16xf32>
      %20 = arith.mulf %1, %19 : vector<3x16xf32>
      %cst_10 = arith.constant dense<0.000000e+00> : vector<3xf32>
      %21 = vector.multi_reduction <add>, %20, %cst_10 [1] : vector<3x16xf32> to vector<3xf32>
      %22 = vector.shape_cast %21 : vector<3xf32> to vector<3x1xf32>
      %23 = vector.broadcast %22 : vector<3x1xf32> to vector<3x16xf32>
      %24 = arith.subf %1, %23 : vector<3x16xf32>
      %25 = arith.mulf %24, %24 : vector<3x16xf32>
      %cst_11 = arith.constant dense<0.000000e+00> : vector<16xf32>
      %26 = vector.multi_reduction <add>, %25, %cst_11 [0] : vector<3x16xf32> to vector<16xf32>
      %27 = vector.shape_cast %26 : vector<16xf32> to vector<1x16xf32>
      %c0_12 = arith.constant 0 : index
      %c0_13 = arith.constant 0 : index
      %28 = vector.load %arg4[%c0_12, %c0_13] : memref<1x16xf32, #tpu.memory_space<vmem>>, vector<1x16xf32>
      %29 = arith.minimumf %28, %27 : vector<1x16xf32>
      %c0_14 = arith.constant 0 : index
      %c0_15 = arith.constant 0 : index
      %30 = vector.load %arg4[%c0_14, %c0_15] : memref<1x16xf32, #tpu.memory_space<vmem>>, vector<1x16xf32>
      tpu.vector_store %arg4[%c0_14, %c0_15], %29 {strides = array<i32>} : memref<1x16xf32, #tpu.memory_space<vmem>>, vector<1x16xf32>,
      %31 = vector.shape_cast %29 : vector<1x16xf32> to vector<1x1x16xf32>
      %cst_16 = arith.constant dense<0xFF800000> : vector<1xf32>
      %32 = vector.multi_reduction <maximumf>, %31, %cst_16 [1, 2] : vector<1x1x16xf32> to vector<1xf32>
      %33 = vector.shape_cast %32 : vector<1xf32> to vector<1x1x1xf32>
      %34 = vector.extract %33[0, 0, 0] : f32 from vector<1x1x1xf32>
      %35 = vector.broadcast %34 : f32 to vector<1x16xf32>
      %36 = arith.cmpf oge, %29, %35 : vector<1x16xf32>
      %cst_17 = arith.constant 1.600000e+01 : f32
      %37 = vector.broadcast %cst_17 : f32 to vector<1x16xf32>
      %38 = arith.select %36, %5, %37 : vector<1x16xi1>, vector<1x16xf32>
      %39 = vector.shape_cast %38 : vector<1x16xf32> to vector<1x1x16xf32>
      %cst_18 = arith.constant dense<0x7F800000> : vector<1xf32>
      %40 = vector.multi_reduction <minimumf>, %39, %cst_18 [1, 2] : vector<1x1x16xf32> to vector<1xf32>
      %41 = vector.shape_cast %40 : vector<1xf32> to vector<1x1x1xf32>
      %42 = vector.extract %41[0, 0, 0] : f32 from vector<1x1x1xf32>
      %43 = arith.fptosi %42 : f32 to i32
      scf.yield %43 : i32
    }
    %c8_i32_5 = arith.constant 8 : i32
    return
  }
  func.func @transform_0(%arg0: i32) -> (i32, i32, i32) {
    %c0_i32 = arith.constant 0 : i32
    %c0_i32_0 = arith.constant 0 : i32
    %c0_i32_1 = arith.constant 0 : i32
    return %arg0, %c0_i32, %c0_i32_0 : i32, i32, i32
  }
  func.func @transform_1(%arg0: i32) -> (i32, i32, i32) {
    %c0_i32 = arith.constant 0 : i32
    %c0_i32_0 = arith.constant 0 : i32
    %c0_i32_1 = arith.constant 0 : i32
    return %arg0, %c0_i32, %c0_i32_0 : i32, i32, i32
  }
  func.func @transform_2(%arg0: i32) -> (i32, i32, i32) {
    %c0_i32 = arith.constant 0 : i32
    %c0_i32_0 = arith.constant 0 : i32
    %c0_i32_1 = arith.constant 0 : i32
    return %arg0, %c0_i32, %c0_i32_0 : i32, i32, i32
  }
}

</mosaic_0001>

<llo_original>
// kernel: tpu_custom_call.1
$region0: #{tpu_custom_call.1}
  #allocation0 [shape = 'u32[]', space=smem, size = 0x4, offset = 0x4, fixed_abs, tag = 'smem constant byte address 0x4 - core index']
  #allocation1 [shape = 'u32[72,128]{1,0:T(1,128)}', space=vmem, size = 0x9000, scoped, tag = 'internal scratch']
  #allocation2 [shape = 'f32[1,16]{1,0:T(1,128)}', space=vmem, size = 0x200, scoped, tag = 'scratch operand']
  %s0 = inlined_call_operand.vmem [shape: f32[2,16,3], index: 0, kind: input, shape index: {}]
  %s1 = inlined_call_operand.vmem [shape: f32[2,3,16], index: 1, kind: input, shape index: {}]
  %s2 = inlined_call_operand.vmem [shape: f32[2,8,3], index: 2, kind: output, shape index: {}]
  %s3 = sld [smem:[#allocation0]]
  $region48: #{tpu_custom_call.1} parent=0
    _
  %s5 = ssub.s32 1, %s3
  %s6 = scalar_select 0, %s5, %s3
  loop: start=0, step=1, limit=4
  $region2: #{tpu_custom_call.1} parent=0 // loop_pre_header
    _
  $region3: #{tpu_custom_call.1} parent=0 // loop_header
    %s8 = sphi 0, %s12
    %p9 = scmp.ge.s32.totalorder %s8, 4
    %s18 = sphi 0, %s20
    %s21 = sphi 0, %s18
    %s22 = sphi 0, %s21
    %s38 = sphi 0, %s22
    %s44 = sphi 0, %s46
    %s47 = sphi 0, %s44
    %s48 = sphi 0, %s47
    %s64 = sphi 0, %s48
    %s70 = sphi 0, %s72
    %s73 = sphi 0, %s70
    %s74 = sphi 0, %s73
    %s90 = sphi 0, %s74
  $region4: #{tpu_custom_call.1} parent=0 // loop_header_branch
    %11 = sbr.rel (%p9) target = $region8
  $region5: #{tpu_custom_call.1} parent=0 // loop_body
    %s13 = ssub.s32 %s8, 1
    %s14 = ssub.s32 %s8, 2
    %s15 = sadd.s32 %s8, 1
    %s16 = ssub.s32 %s8, %s15
    %p17 = scmp.eq.s32.totalorder %s16, 0
    %s19 = sadd.s32 %s18, 1
    %s20 = scalar_select %p17, %s18, %s19
    %p23 = pneg %p17
    %p24 = scmp.eq.s32.totalorder %s8, 1
    %p25 = por %p23, %p24
    %p26 = scmp.ne.s32.totalorder %s18, %s21
    %p27 = scmp.eq.s32.totalorder %s8, 0
    %p28 = por %p26, %p27
    %p29 = scmp.ne.s32.totalorder %s18, %s21
    %p30 = scmp.eq.s32.totalorder %s13, 1
    %p31 = por %p29, %p30
    %p32 = scmp.ne.s32.totalorder %s21, %s22
    %p33 = scmp.eq.s32.totalorder %s13, 0
    %p34 = por %p32, %p33
    %p35 = scmp.ne.s32.totalorder %s21, %s22
    %p36 = scmp.eq.s32.totalorder %s14, 1
    %p37 = por %p35, %p36
    %p39 = scmp.ne.s32.totalorder %s22, %s38
    %p40 = scmp.eq.s32.totalorder %s14, 0
    %p41 = por %p39, %p40
    %s42 = ssub.s32 %s8, %s15
    %p43 = scmp.eq.s32.totalorder %s42, 0
    %s45 = sadd.s32 %s44, 1
    %s46 = scalar_select %p43, %s44, %s45
    %p49 = pneg %p43
    %p50 = scmp.eq.s32.totalorder %s8, 1
    %p51 = por %p49, %p50
    %p52 = scmp.ne.s32.totalorder %s44, %s47
    %p53 = scmp.eq.s32.totalorder %s8, 0
    %p54 = por %p52, %p53
    %p55 = scmp.ne.s32.totalorder %s44, %s47
    %p56 = scmp.eq.s32.totalorder %s13, 1
    %p57 = por %p55, %p56
    %p58 = scmp.ne.s32.totalorder %s47, %s48
    %p59 = scmp.eq.s32.totalorder %s13, 0
    %p60 = por %p58, %p59
    %p61 = scmp.ne.s32.totalorder %s47, %s48
    %p62 = scmp.eq.s32.totalorder %s14, 1
    %p63 = por %p61, %p62
    %p65 = scmp.ne.s32.totalorder %s48, %s64
    %p66 = scmp.eq.s32.totalorder %s14, 0
    %p67 = por %p65, %p66
    %s68 = ssub.s32 %s8, %s15
    %p69 = scmp.eq.s32.totalorder %s68, 0
    %s71 = sadd.s32 %s70, 1
    %s72 = scalar_select %p69, %s70, %s71
    %p75 = pneg %p69
    %p76 = scmp.eq.s32.totalorder %s8, 1
    %p77 = por %p75, %p76
    %p78 = scmp.ne.s32.totalorder %s70, %s73
    %p79 = scmp.eq.s32.totalorder %s8, 0
    %p80 = por %p78, %p79
    %p81 = scmp.ne.s32.totalorder %s70, %s73
    %p82 = scmp.eq.s32.totalorder %s13, 1
    %p83 = por %p81, %p82
    %p84 = scmp.ne.s32.totalorder %s73, %s74
    %p85 = scmp.eq.s32.totalorder %s13, 0
    %p86 = por %p84, %p85
    %p87 = scmp.ne.s32.totalorder %s73, %s74
    %p88 = scmp.eq.s32.totalorder %s14, 1
    %p89 = por %p87, %p88
    %p91 = scmp.ne.s32.totalorder %s74, %s90
    %p92 = scmp.eq.s32.totalorder %s14, 0
    %p93 = por %p91, %p92
    %p94 = scmp.le.s32.totalorder 1, %s8
    %p95 = scmp.lt.s32.totalorder %s8, 3
    %p96 = pnand %p94, %p95
    %p97 = pneg %p96
    // Predicated region
    $region9: #{tpu_custom_call.1} parent=5 // pred_check
      _
    $region10: #{tpu_custom_call.1} parent=5 // pred_check_branch
      %99 = sbr.rel (%p96) target = $region12
    $region11: #{tpu_custom_call.1} parent=5 // pred_region
      %s100 = ssub.s32 %s8, 1
    $region12: #{tpu_custom_call.1} parent=5 // pred_fallthru
      _
    %p101 = scmp.lt.s32.totalorder %s8, 2
    // Predicated region
    $region13: #{tpu_custom_call.1} parent=5 // pred_check
      %p102 = pneg %p101
    $region14: #{tpu_custom_call.1} parent=5 // pred_check_branch
      %104 = sbr.rel (%p102) target = $region16
    $region15: #{tpu_custom_call.1} parent=5 // pred_region
      // Predicated region
      $region17: #{tpu_custom_call.1} parent=15 // pred_check
        %p105 = pneg %p28
      $region18: #{tpu_custom_call.1} parent=15 // pred_check_branch
        %107 = sbr.rel (%p105) target = $region20
      $region19: #{tpu_custom_call.1} parent=15 // pred_region
        %p108 = scmp.lt.s32.totalorder %s8, 1
        %s109 = scalar_select %p108, %s8, 1
        %s110 = smul.addr %s109, 2
        %s111 = smul.addr %s110, 8
        %s112 = scalar_lea.vmem %s0, %s111
      $region20: #{tpu_custom_call.1} parent=15 // pred_fallthru
        _
      // Predicated region
      $region21: #{tpu_custom_call.1} parent=15 // pred_check
        %p113 = pneg %p54
      $region22: #{tpu_custom_call.1} parent=15 // pred_check_branch
        %115 = sbr.rel (%p113) target = $region24
      $region23: #{tpu_custom_call.1} parent=15 // pred_region
        %p116 = scmp.lt.s32.totalorder %s8, 1
        %s117 = scalar_select %p116, %s8, 1
        %s118 = smul.addr %s117, 4
        %s119 = scalar_lea.vmem %s1, %s118
      $region24: #{tpu_custom_call.1} parent=15 // pred_fallthru
        _
    $region16: #{tpu_custom_call.1} parent=5 // pred_fallthru
      _
    %p120 = scmp.le.s32.totalorder 1, %s8
    %p121 = scmp.lt.s32.totalorder %s8, 3
    %p122 = pnand %p120, %p121
    %p123 = pneg %p122
    // Predicated region
    $region25: #{tpu_custom_call.1} parent=5 // pred_check
      _
    $region26: #{tpu_custom_call.1} parent=5 // pred_check_branch
      %125 = sbr.rel (%p122) target = $region28
    $region27: #{tpu_custom_call.1} parent=5 // pred_region
      %s126 = ssub.s32 %s8, 1
      %p127 = scmp.lt.s32.totalorder %s13, 1
      %s128 = scalar_select %p127, %s13, 1
      %s129 = smul.addr %s128, 2
      %s130 = smul.addr %s129, 8
      %s131 = scalar_lea.vmem %s0, %s130
      %p132 = pneg %p34
      %p133 = pneg %p31
      %p134 = scmp.lt.s32.totalorder %s13, 1
      %s135 = scalar_select %p134, %s13, 1
      %s136 = smul.addr %s135, 4
      %s137 = scalar_lea.vmem %s1, %s136
      %p138 = pneg %p60
      %p139 = pneg %p57
      %p140 = pneg %p86
      %p141 = pneg %p83
      %p142 = scmp.lt.s32.totalorder %s13, 1
      %s143 = scalar_select %p142, %s13, 1
      %s144 = smul.addr %s143, 8
      %s145 = scalar_lea.vmem %s2, %s144
      %p146 = scmp.lt.s32.totalorder %s13, 1
      %s147 = scalar_select %p146, %s13, 1
      %s148 = smul.addr %s147, 2
      %s149 = smul.addr %s148, 8
      %s150 = scalar_lea.vmem %s0, %s149
      %p151 = scmp.lt.s32.totalorder %s13, 1
      %s152 = scalar_select %p151, %s13, 1
      %s153 = smul.addr %s152, 4
      %s154 = scalar_lea.vmem %s1, %s153
      %p155 = scmp.lt.s32.totalorder %s13, 1
      %s156 = scalar_select %p155, %s13, 1
      %s157 = smul.addr %s156, 8
      %s158 = scalar_lea.vmem %s2, %s157
      %v159 = vld [vmem:[%s154] sm:$0x7]
      %vm160 = vcmask 122880
      %161 = vst.msk [vmem:[#allocation2] sm:$0x1] %vm160, 1e+10
      %v162 = vlaneseq
      %v163 = vand.u32 %v162, 127
      %v164 = vcvt.s32.f32 %v163
      loop: start=0, step=1, limit=8
      $region29: #{tpu_custom_call.1} parent=27 // loop_pre_header
        _
      $region30: #{tpu_custom_call.1} parent=27 // loop_header
        %s166 = sphi 0, %s170
        %p167 = scmp.ge.s32.totalorder %s166, 8
        %s171 = sphi 0, %s221
      $region31: #{tpu_custom_call.1} parent=27 // loop_header_branch
        %169 = sbr.rel (%p167) target = $region35
      $region32: #{tpu_custom_call.1} parent=27 // loop_body
        %s172 = scalar_lea.vmem %s150, %s171
        %v173 = vld [vmem:[%s172] sm:$0x1]
        %s174 = scalar_lea.vmem %s158, %s166
        %vm175 = vcmask 16384
        %176 = vst.msk [vmem:[%s174] sm:$0x1] %vm175, %v173
        %v177 = vstv %s171
        %vm178 = vcmp.eq.s32.totalorder %v163, %v177
        %v179 = vsel %vm178, 1, 0
        %v180 = vcvt.s32.f32 %v179
        %v181 = vmul.f32 %v159, %v180
        %vm182 = vcmask 124928
        %v183 = vsel %vm182, %v181, 0.0
        %184 = vadd.xlane.f32.xlu0 %v183
        %v185 = vpop.xlane.xlu0 %184
        %v186 = vsub.f32 %v159, %v185
        %v187 = vmul.f32 %v186, %v186
        %v188 = vsel %vm182, %v187, 0.0
        %v189 = vrot.slane %v188, 4
        %v190 = vadd.f32 %v188, %v189
        %v191 = vrot.slane %v190, 2
        %v192 = vadd.f32 %v190, %v191
        %v193 = vrot.slane %v192, 1
        %v194 = vadd.f32 %v192, %v193
        %v195 = vld [vmem:[#allocation2] sm:$0x1]
        %v196 = vmin.f32 %v195, %v194
        %197 = vst.msk [vmem:[#allocation2] sm:$0x1] %vm160, %v196
        %v198 = vsel %vm160, %v196, -inf
        %199 = vmax.xlane.f32.xlu0 %v198
        %v200 = vpop.xlane.xlu0 %199
        %v201 = vrot.slane %v200, 4
        %v202 = vmax.f32 %v200, %v201
        %v203 = vrot.slane %v202, 2
        %v204 = vmax.f32 %v202, %v203
        %v205 = vrot.slane %v204, 1
        %v206 = vmax.f32 %v204, %v205
        %s207 = vtos %v206
        %v208 = vstv %s207
        %vm209 = vcmp.ge.f32.partialorder %v196, %v208
        %v210 = vsel %vm209, %v164, 16.0
        %v211 = vsel %vm160, %v210, inf
        %212 = vmin.xlane.f32.xlu0 %v211
        %v213 = vpop.xlane.xlu0 %212
        %v214 = vrot.slane %v213, 4
        %v215 = vmin.f32 %v213, %v214
        %v216 = vrot.slane %v215, 2
        %v217 = vmin.f32 %v215, %v216
        %v218 = vrot.slane %v217, 1
        %v219 = vmin.f32 %v217, %v218
        %s220 = vtos %v219
        %s221 = scvt.f32.s32.to.zero.pseudo %s220
      $region33: #{tpu_custom_call.1} parent=27 // loop_footer
        %s170 = sadd.s32 1, %s166
      $region34: #{tpu_custom_call.1} parent=27 // loop_footer_branch
        %165 = sbr.rel target = $region30
      $region35: #{tpu_custom_call.1} parent=27 // loop_exit
        _
      %p222 = scmp.lt.s32.totalorder %s13, 1
      %s223 = scalar_select %p222, %s13, 1
      %s224 = smul.addr %s223, 8
      %s225 = scalar_lea.vmem %s2, %s224
      // Predicated region
      $region36: #{tpu_custom_call.1} parent=27 // pred_check
        %p226 = pneg %p83
      $region37: #{tpu_custom_call.1} parent=27 // pred_check_branch
        %228 = sbr.rel (%p226) target = $region39
      $region38: #{tpu_custom_call.1} parent=27 // pred_region
        _
      $region39: #{tpu_custom_call.1} parent=27 // pred_fallthru
        _
    $region28: #{tpu_custom_call.1} parent=5 // pred_fallthru
      _
    %p229 = scmp.le.s32.totalorder 2, %s8
    // Predicated region
    $region40: #{tpu_custom_call.1} parent=5 // pred_check
      %p230 = pneg %p229
    $region41: #{tpu_custom_call.1} parent=5 // pred_check_branch
      %232 = sbr.rel (%p230) target = $region43
    $region42: #{tpu_custom_call.1} parent=5 // pred_region
      %s233 = ssub.s32 %s8, 2
      // Predicated region
      $region44: #{tpu_custom_call.1} parent=42 // pred_check
        %p234 = pneg %p89
      $region45: #{tpu_custom_call.1} parent=42 // pred_check_branch
        %236 = sbr.rel (%p234) target = $region47
      $region46: #{tpu_custom_call.1} parent=42 // pred_region
        %p237 = scmp.lt.s32.totalorder %s14, 1
        %s238 = scalar_select %p237, %s14, 1
        %s239 = smul.addr %s238, 8
        %s240 = scalar_lea.vmem %s2, %s239
      $region47: #{tpu_custom_call.1} parent=42 // pred_fallthru
        _
    $region43: #{tpu_custom_call.1} parent=5 // pred_fallthru
      _
  $region6: #{tpu_custom_call.1} parent=0 // loop_footer
    %s12 = sadd.s32 1, %s8
  $region7: #{tpu_custom_call.1} parent=0 // loop_footer_branch
    %7 = sbr.rel target = $region3
  $region8: #{tpu_custom_call.1} parent=0 // loop_exit
    _

</llo_original>
